<compile_context>
chip_gen: v6e
topology: v6e:2x2x1
jax: 0.10.0
libtpu: 0.0.40
codegen_flags: <defaults>
</compile_context>

<pallas_src>
import math
import jax
import jax.numpy as jnp
from jax.experimental import pallas as pl
from jax.experimental.pallas import tpu as pltpu


# ----------------------------------------------------------------------------
# Pallas kernel: fused  gather -> silu(x @ W1 + b1) -> silu(. @ W2 + b2)
# ----------------------------------------------------------------------------
def _diffusion_embedding_kernel(step_ref, emb_ref, w1_ref, b1_ref, w2_ref,
                                b2_ref, o_ref):
    steps = step_ref[...]                                      # (tm, 1) int32
    tm = steps.shape[0]
    n_pad = emb_ref.shape[0]                                   # padded rows

    # In-kernel gather: exact one-hot row selection via MXU matmul.
    iota = jax.lax.broadcasted_iota(jnp.int32, (tm, n_pad), 1)
    onehot = (iota == steps).astype(emb_ref.dtype)             # (tm, n_pad)
    x = jnp.dot(onehot, emb_ref[...],
                preferred_element_type=jnp.float32)            # (tm, E)

    h = jnp.dot(x.astype(w1_ref.dtype), w1_ref[...],
                preferred_element_type=jnp.float32) + b1_ref[...]   # (tm, P)
    # SiLU via single-tanh identity: x*sigmoid(x) == 0.5*x*(1+tanh(x/2))
    h = 0.5 * h * (1.0 + jnp.tanh(0.5 * h))
    y = jnp.dot(h.astype(w2_ref.dtype), w2_ref[...],
                preferred_element_type=jnp.float32) + b2_ref[...]   # (tm, P)
    y = 0.5 * y * (1.0 + jnp.tanh(0.5 * y))
    o_ref[...] = y.astype(o_ref.dtype)


def _round_up(x, m):
    return (x + m - 1) // m * m


# Minimum batch at which we split the grid into >= 2 steps so both v7x
# TensorCores get work even when B <= row_tile.
_MEGACORE_SPLIT_MIN_B = 512


def diffusion_embedding_forward(diffusion_step, params, *, row_tile=1024,
                                out_dtype=jnp.float32):
    """diffusion_step: () or (B,) int; params = (emb, w1_t, b1, w2_t, b2)."""
    emb, w1_t, b1, w2_t, b2 = params
    n_pad, E = emb.shape
    P = w1_t.shape[1]

    squeeze = (diffusion_step.ndim == 0)
    steps = jnp.atleast_1d(diffusion_step).astype(jnp.int32)
    B = steps.shape[0]
    steps2d = steps[:, None]                                   # (B, 1)

    # Row-tile selection (all second-to-last block dims multiple of 8 or == B).
    row_tile = max(8, _round_up(row_tile, 8))
    if B > row_tile:
        # Prefer the largest tile that still gives >= 2 grid steps.
        tm = min(row_tile, _round_up(pl.cdiv(B, 2), 8))
    elif B >= _MEGACORE_SPLIT_MIN_B:
        # Split into 2 parallel steps so v7x's second TensorCore isn't idle.
        tm = _round_up(pl.cdiv(B, 2), 8)
    else:
        tm = B                                                 # single full block
    num_blocks = pl.cdiv(B, tm)

    flops = 2 * B * (n_pad * E + E * P + P * P)
    transcendentals = 2 * B * P                                # one tanh per SiLU elem
    bytes_accessed = (steps.size * 4 + B * P * 4
                      + (emb.size + w1_t.size + w2_t.size) * emb.dtype.itemsize
                      + (b1.size + b2.size) * 4)
    cost = pl.CostEstimate(flops=flops, transcendentals=transcendentals,
                           bytes_accessed=bytes_accessed)

    vmem = pltpu.MemorySpace.VMEM
    out = pl.pallas_call(
        _diffusion_embedding_kernel,
        out_shape=jax.ShapeDtypeStruct((B, P), out_dtype),
        grid=(num_blocks,),
        in_specs=[
            pl.BlockSpec((tm, 1), lambda i: (i, 0), memory_space=vmem),
            pl.BlockSpec((n_pad, E), lambda i: (0, 0), memory_space=vmem),
            pl.BlockSpec((E, P), lambda i: (0, 0), memory_space=vmem),
            pl.BlockSpec((1, P), lambda i: (0, 0), memory_space=vmem),
            pl.BlockSpec((P, P), lambda i: (0, 0), memory_space=vmem),
            pl.BlockSpec((1, P), lambda i: (0, 0), memory_space=vmem),
        ],
        out_specs=pl.BlockSpec((tm, P), lambda i: (i, 0), memory_space=vmem),
        compiler_params=pltpu.CompilerParams(
            dimension_semantics=("parallel",)),
        cost_estimate=cost,
    )(steps2d, emb, w1_t, b1, w2_t, b2)

    return out[0] if squeeze else out


# ----------------------------------------------------------------------------
# Tiny-batch inference fast path: project the whole (padded) table once with
# the fused kernel, then per-step forward is a pure gather (no MLP launch).
# Only valid while the projection weights are frozen (inference sampling).
# ----------------------------------------------------------------------------
def precompute_projected_table(params):
    n_pad = params[0].shape[0]
    all_steps = jnp.arange(n_pad, dtype=jnp.int32)
    return diffusion_embedding_forward(all_steps, params)


def forward_from_table(diffusion_step, table):
    return table[diffusion_step]


# ----------------------------------------------------------------------------
# Module-equivalent setup (embedding table + deterministic parameter init)
# ----------------------------------------------------------------------------
def build_embedding(num_steps, dim, pad_rows_to=64):
    """Matches DiffusionEmbedding._build_embedding (dim = embedding_dim / 2).

    Rows are zero-padded up to a multiple of `pad_rows_to` so the in-kernel
    one-hot gather matmul has an aligned K dimension; valid step indices
    (< num_steps) never select the padding rows.
    """
    steps = jnp.arange(num_steps, dtype=jnp.float32)[:, None]            # (N, 1)
    freqs = 10.0 ** (jnp.arange(dim, dtype=jnp.float32)
                     / (dim - 1.0) * 4.0)[None, :]                       # (1, dim)
    table = steps * freqs                                                # (N, dim)
    table = jnp.concatenate([jnp.sin(table), jnp.cos(table)], axis=1)    # (N, 2*dim)
    n_pad = _round_up(num_steps, pad_rows_to)
    if n_pad != num_steps:
        table = jnp.pad(table, ((0, n_pad - num_steps), (0, 0)))
    return table


def init_diffusion_embedding(key, num_steps, embedding_dim=128,
                             projection_dim=None, dtype=jnp.float32):
    """Params stored kernel-ready: weights (in, out), biases (1, out).

    `dtype` applies to the embedding table and weight matrices (use
    jnp.bfloat16 on v6e/v7x to halve weight traffic and hit the bf16 MXU;
    note that loosens the 1e-5 reference tolerance).  Biases stay f32.
    """
    if projection_dim is None:
        projection_dim = embedding_dim
    emb = build_embedding(num_steps, embedding_dim // 2)
    k1, k2, k3, k4 = jax.random.split(key, 4)
    lim1 = 1.0 / math.sqrt(embedding_dim)
    lim2 = 1.0 / math.sqrt(projection_dim)
    w1_t = jax.random.uniform(k1, (embedding_dim, projection_dim),
                              jnp.float32, -lim1, lim1)
    b1 = jax.random.uniform(k2, (1, projection_dim), jnp.float32, -lim1, lim1)
    w2_t = jax.random.uniform(k3, (projection_dim, projection_dim),
                              jnp.float32, -lim2, lim2)
    b2 = jax.random.uniform(k4, (1, projection_dim), jnp.float32, -lim2, lim2)
    return (emb.astype(dtype), w1_t.astype(dtype), b1,
            w2_t.astype(dtype), b2)


# ----------------------------------------------------------------------------
# Reference in plain JAX (sanity check)
# ----------------------------------------------------------------------------
def reference_forward(diffusion_step, params):
    emb, w1_t, b1, w2_t, b2 = params
    x = emb.astype(jnp.float32)[diffusion_step]
    x = x @ w1_t.astype(jnp.float32) + b1
    x = x * jax.nn.sigmoid(x)
    x = x @ w2_t.astype(jnp.float32) + b2
    x = x * jax.nn.sigmoid(x)
    return x


if __name__ == "__main__":
    num_steps = 50
    embedding_dim = 128
    projection_dim = 128
    batch = 8

    key = jax.random.PRNGKey(0)
    k_params, k_steps = jax.random.split(key)

    params = init_diffusion_embedding(k_params, num_steps, embedding_dim,
                                      projection_dim)
    diffusion_step = jax.random.randint(k_steps, (batch,), 0, num_steps,
                                        dtype=jnp.int32)

    # Small-batch path (single full block, grid=(1,)).
    fwd = jax.jit(diffusion_embedding_forward)
    out = jax.block_until_ready(fwd(diffusion_step, params))
    ref = reference_forward(diffusion_step, params)
    assert out.shape == (batch, projection_dim)
    assert jnp.allclose(out, ref, atol=1e-5, rtol=1e-5), "mismatch vs reference"

    # Multi-step grid with a ragged boundary block (masked writeback path).
    big_steps = jax.random.randint(jax.random.PRNGKey(1), (300,), 0, num_steps,
                                   dtype=jnp.int32)
    fwd_big = jax.jit(lambda s, p: diffusion_embedding_forward(s, p,
                                                               row_tile=128))
    out_big = jax.block_until_ready(fwd_big(big_steps, params))
    ref_big = reference_forward(big_steps, params)
    assert out_big.shape == (300, projection_dim)
    assert jnp.allclose(out_big, ref_big, atol=1e-5, rtol=1e-5), \
        "ragged-grid mismatch vs reference"

    # Tiny-batch inference fast path: one kernel launch at init, then gather.
    table = jax.block_until_ready(precompute_projected_table(params))
    out_fast = forward_from_table(diffusion_step, table)
    assert jnp.allclose(out_fast, ref, atol=1e-5, rtol=1e-5), \
        "precomputed-table mismatch vs reference"

    # TODO(synk): on v6e/v7x, pass dtype=jnp.bfloat16 to init (and
    # out_dtype=jnp.bfloat16) once a looser-than-1e-5 tolerance is acceptable.

    print("KERNEL_OK")
</pallas_src>

<mosaic_0001>
module attributes {stable_mosaic.version = 11 : i64} {
  func.func @_diffusion_embedding_kernel(%arg0: i32, %arg1: memref<8x1xi32, #tpu.memory_space<vmem>>, %arg2: memref<64x128xf32, #tpu.memory_space<vmem>>, %arg3: memref<128x128xf32, #tpu.memory_space<vmem>>, %arg4: memref<1x128xf32, #tpu.memory_space<vmem>>, %arg5: memref<128x128xf32, #tpu.memory_space<vmem>>, %arg6: memref<1x128xf32, #tpu.memory_space<vmem>>, %arg7: memref<8x128xf32, #tpu.memory_space<vmem>>) attributes {dimension_semantics = [#tpu.dimension_semantics<parallel>], iteration_bounds = array<i64: 1>, scalar_prefetch = 0 : i64, scratch_operands = 0 : i64, tpu.core_type = #tpu.core_type<tc>, window_params = [{transform_indices = @transform_0, window_bounds = array<i64: 8, 1>}, {pipeline_mode = #tpu.pipeline_mode<synchronous>, transform_indices = @transform_1, window_bounds = array<i64: 64, 128>}, {pipeline_mode = #tpu.pipeline_mode<synchronous>, transform_indices = @transform_2, window_bounds = array<i64: 128, 128>}, {pipeline_mode = #tpu.pipeline_mode<synchronous>, transform_indices = @transform_3, window_bounds = array<i64: 1, 128>}, {pipeline_mode = #tpu.pipeline_mode<synchronous>, transform_indices = @transform_4, window_bounds = array<i64: 128, 128>}, {pipeline_mode = #tpu.pipeline_mode<synchronous>, transform_indices = @transform_5, window_bounds = array<i64: 1, 128>}, {transform_indices = @transform_6, window_bounds = array<i64: 8, 128>}]} {
    %c0 = arith.constant 0 : index
    %c0_0 = arith.constant 0 : index
    %0 = vector.load %arg1[%c0, %c0_0] : memref<8x1xi32, #tpu.memory_space<vmem>>, vector<8x1xi32>
    %1 = tpu.iota {dimensions = array<i32: 1>} : vector<8x64xi32>
    %2 = vector.broadcast %0 : vector<8x1xi32> to vector<8x64xi32>
    %3 = arith.cmpi eq, %1, %2 : vector<8x64xi32>
    %4 = arith.extui %3 : vector<8x64xi1> to vector<8x64xi32>
    %5 = arith.sitofp %4 : vector<8x64xi32> to vector<8x64xf32>
    %c0_1 = arith.constant 0 : index
    %c0_2 = arith.constant 0 : index
    %6 = vector.load %arg2[%c0_1, %c0_2] : memref<64x128xf32, #tpu.memory_space<vmem>>, vector<64x128xf32>
    %cst = arith.constant dense<0.000000e+00> : vector<8x128xf32>
    %7 = tpu.matmul %5, %6, %cst {dimension_numbers = #tpu.dot_dimension_numbers<[1], [0], [0], [1], [0, 0, 1, 1], [], []>} : vector<8x64xf32>, vector<64x128xf32>, vector<8x128xf32> -> vector<8x128xf32>
    %c0_3 = arith.constant 0 : index
    %c0_4 = arith.constant 0 : index
    %8 = vector.load %arg3[%c0_3, %c0_4] : memref<128x128xf32, #tpu.memory_space<vmem>>, vector<128x128xf32>
    %cst_5 = arith.constant dense<0.000000e+00> : vector<8x128xf32>
    %9 = tpu.matmul %7, %8, %cst_5 {dimension_numbers = #tpu.dot_dimension_numbers<[1], [0], [0], [1], [0, 0, 1, 1], [], []>} : vector<8x128xf32>, vector<128x128xf32>, vector<8x128xf32> -> vector<8x128xf32>
    %c0_6 = arith.constant 0 : index
    %c0_7 = arith.constant 0 : index
    %10 = vector.load %arg4[%c0_6, %c0_7] : memref<1x128xf32, #tpu.memory_space<vmem>>, vector<1x128xf32>
    %11 = vector.broadcast %10 : vector<1x128xf32> to vector<8x128xf32>
    %12 = arith.addf %9, %11 : vector<8x128xf32>
    %cst_8 = arith.constant 5.000000e-01 : f32
    %13 = vector.broadcast %cst_8 : f32 to vector<8x128xf32>
    %14 = arith.mulf %13, %12 : vector<8x128xf32>
    %cst_9 = arith.constant 5.000000e-01 : f32
    %15 = vector.broadcast %cst_9 : f32 to vector<8x128xf32>
    %16 = arith.mulf %15, %12 : vector<8x128xf32>
    %17 = math.tanh %16 : vector<8x128xf32>
    %cst_10 = arith.constant 1.000000e+00 : f32
    %18 = vector.broadcast %cst_10 : f32 to vector<8x128xf32>
    %19 = arith.addf %18, %17 : vector<8x128xf32>
    %20 = arith.mulf %14, %19 : vector<8x128xf32>
    %c0_11 = arith.constant 0 : index
    %c0_12 = arith.constant 0 : index
    %21 = vector.load %arg5[%c0_11, %c0_12] : memref<128x128xf32, #tpu.memory_space<vmem>>, vector<128x128xf32>
    %cst_13 = arith.constant dense<0.000000e+00> : vector<8x128xf32>
    %22 = tpu.matmul %20, %21, %cst_13 {dimension_numbers = #tpu.dot_dimension_numbers<[1], [0], [0], [1], [0, 0, 1, 1], [], []>} : vector<8x128xf32>, vector<128x128xf32>, vector<8x128xf32> -> vector<8x128xf32>
    %c0_14 = arith.constant 0 : index
    %c0_15 = arith.constant 0 : index
    %23 = vector.load %arg6[%c0_14, %c0_15] : memref<1x128xf32, #tpu.memory_space<vmem>>, vector<1x128xf32>
    %24 = vector.broadcast %23 : vector<1x128xf32> to vector<8x128xf32>
    %25 = arith.addf %22, %24 : vector<8x128xf32>
    %cst_16 = arith.constant 5.000000e-01 : f32
    %26 = vector.broadcast %cst_16 : f32 to vector<8x128xf32>
    %27 = arith.mulf %26, %25 : vector<8x128xf32>
    %cst_17 = arith.constant 5.000000e-01 : f32
    %28 = vector.broadcast %cst_17 : f32 to vector<8x128xf32>
    %29 = arith.mulf %28, %25 : vector<8x128xf32>
    %30 = math.tanh %29 : vector<8x128xf32>
    %cst_18 = arith.constant 1.000000e+00 : f32
    %31 = vector.broadcast %cst_18 : f32 to vector<8x128xf32>
    %32 = arith.addf %31, %30 : vector<8x128xf32>
    %33 = arith.mulf %27, %32 : vector<8x128xf32>
    %c0_19 = arith.constant 0 : index
    %c0_20 = arith.constant 0 : index
    %34 = vector.load %arg7[%c0_19, %c0_20] : memref<8x128xf32, #tpu.memory_space<vmem>>, vector<8x128xf32>
    tpu.vector_store %arg7[%c0_19, %c0_20], %33 {strides = array<i32>} : memref<8x128xf32, #tpu.memory_space<vmem>>, vector<8x128xf32>,
    return
  }
  func.func @transform_0(%arg0: i32) -> (i32, i32) {
    %c0_i32 = arith.constant 0 : i32
    %c0_i32_0 = arith.constant 0 : i32
    return %arg0, %c0_i32 : i32, i32
  }
  func.func @transform_1(%arg0: i32) -> (i32, i32) {
    %c0_i32 = arith.constant 0 : i32
    %c0_i32_0 = arith.constant 0 : i32
    %c0_i32_1 = arith.constant 0 : i32
    return %c0_i32, %c0_i32_0 : i32, i32
  }
  func.func @transform_2(%arg0: i32) -> (i32, i32) {
    %c0_i32 = arith.constant 0 : i32
    %c0_i32_0 = arith.constant 0 : i32
    %c0_i32_1 = arith.constant 0 : i32
    return %c0_i32, %c0_i32_0 : i32, i32
  }
  func.func @transform_3(%arg0: i32) -> (i32, i32) {
    %c0_i32 = arith.constant 0 : i32
    %c0_i32_0 = arith.constant 0 : i32
    %c0_i32_1 = arith.constant 0 : i32
    return %c0_i32, %c0_i32_0 : i32, i32
  }
  func.func @transform_4(%arg0: i32) -> (i32, i32) {
    %c0_i32 = arith.constant 0 : i32
    %c0_i32_0 = arith.constant 0 : i32
    %c0_i32_1 = arith.constant 0 : i32
    return %c0_i32, %c0_i32_0 : i32, i32
  }
  func.func @transform_5(%arg0: i32) -> (i32, i32) {
    %c0_i32 = arith.constant 0 : i32
    %c0_i32_0 = arith.constant 0 : i32
    %c0_i32_1 = arith.constant 0 : i32
    return %c0_i32, %c0_i32_0 : i32, i32
  }
  func.func @transform_6(%arg0: i32) -> (i32, i32) {
    %c0_i32 = arith.constant 0 : i32
    %c0_i32_0 = arith.constant 0 : i32
    return %arg0, %c0_i32 : i32, i32
  }
}

</mosaic_0001>

<llo_original>
// kernel: diffusion_embedding_forward.1
$region0: #{diffusion_embedding_forward.1}
  #allocation0 [shape = 'u32[]', space=smem, size = 0x4, offset = 0x4, fixed_abs, tag = 'smem constant byte address 0x4 - core index']
  #allocation1 [shape = 'u32[144,128]{1,0:T(1,128)}', space=vmem, size = 0x12000, scoped, tag = 'internal scratch']
  %s0 = inlined_call_operand.vmem [shape: s32[8,1], index: 0, kind: input, shape index: {}]
  %s1 = inlined_call_operand.hbm [shape: f32[64,128], index: 1, kind: input, shape index: {}]
  %s2 = inlined_call_operand.hbm [shape: f32[128,128], index: 2, kind: input, shape index: {}]
  %s3 = inlined_call_operand.vmem [shape: f32[1,128], index: 3, kind: input, shape index: {}]
  %s4 = inlined_call_operand.hbm [shape: f32[128,128], index: 4, kind: input, shape index: {}]
  %s5 = inlined_call_operand.vmem [shape: f32[1,128], index: 5, kind: input, shape index: {}]
  %s6 = inlined_call_operand.hbm [shape: f32[8,128], index: 6, kind: output, shape index: {}]
  %s7 = sld [smem:[#allocation0]]
  $region46: #{diffusion_embedding_forward.1} parent=0
    _
  %s9 = ssub.s32 1, %s7
  %s10 = scalar_select 0, %s9, %s7
  $region1: #{diffusion_embedding_forward.1} parent=0
    #allocation2 [shape = 'u8[32768]{0}', space=vmem, size = 0x8000, scoped, tag = 'input window, operand 1, single buffered']
    #allocation3 [shape = 's32[1]{0}', space=sflag, size = 0x4, scoped, tag = 'scoped memory for diffusion_embedding_forward.1']
    #allocation4 [shape = 's32[1]{0}', space=sflag, size = 0x4, scoped, tag = 'scoped memory for diffusion_embedding_forward.1']
    #allocation5 [shape = 'u8[65536]{0}', space=vmem, size = 0x10000, scoped, tag = 'input window, operand 2, single buffered']
    #allocation6 [shape = 's32[1]{0}', space=sflag, size = 0x4, scoped, tag = 'scoped memory for diffusion_embedding_forward.1']
    #allocation7 [shape = 'u8[65536]{0}', space=vmem, size = 0x10000, scoped, tag = 'input window, operand 4, single buffered']
    #allocation8 [shape = 'u8[4096]{0}', space=vmem, size = 0x1000, scoped, tag = 'output window, operand 0, single buffered']
    %11 = vsyncpa [#allocation3], 0
    %12 = vsyncpa [#allocation6], 0
    %13 = vsyncpa [#allocation4], 0
    // Predicated region
    $region2: #{diffusion_embedding_forward.1} parent=1 // pred_check
      _
    $region3: #{diffusion_embedding_forward.1} parent=1 // pred_check_branch
      %15 = sbr.rel (0) target = $region5
    $region4: #{diffusion_embedding_forward.1} parent=1 // pred_region
      _
    $region5: #{diffusion_embedding_forward.1} parent=1 // pred_fallthru
      _
    // Predicated region
    $region6: #{diffusion_embedding_forward.1} parent=1 // pred_check
      _
    $region7: #{diffusion_embedding_forward.1} parent=1 // pred_check_branch
      %17 = sbr.rel (0) target = $region9
    $region8: #{diffusion_embedding_forward.1} parent=1 // pred_region
      %s19 = ssub.s32 1024, 1024
      %20 = vsyncadd [#allocation3], %s19
      %s21 = sshll.u32 [#allocation2], 4
      %s22 = int_to_ptr.vmem [resolvable:$true] %s21
      %27 = dma.hbm_to_vmem [thread:$0]  %s1, 1024, %s22, [#allocation3], 128, 128, 8
    $region9: #{diffusion_embedding_forward.1} parent=1 // pred_fallthru
      _
    // Predicated region
    $region10: #{diffusion_embedding_forward.1} parent=1 // pred_check
      _
    $region11: #{diffusion_embedding_forward.1} parent=1 // pred_check_branch
      %29 = sbr.rel (0) target = $region13
    $region12: #{diffusion_embedding_forward.1} parent=1 // pred_region
      %s31 = ssub.s32 2048, 2048
      %32 = vsyncadd [#allocation6], %s31
      %s33 = sshll.u32 [#allocation5], 4
      %s34 = int_to_ptr.vmem [resolvable:$true] %s33
      %39 = dma.hbm_to_vmem [thread:$0]  %s2, 2048, %s34, [#allocation6], 128, 128, 8
    $region13: #{diffusion_embedding_forward.1} parent=1 // pred_fallthru
      _
    // Predicated region
    $region14: #{diffusion_embedding_forward.1} parent=1 // pred_check
      _
    $region15: #{diffusion_embedding_forward.1} parent=1 // pred_check_branch
      %41 = sbr.rel (0) target = $region17
    $region16: #{diffusion_embedding_forward.1} parent=1 // pred_region
      _
    $region17: #{diffusion_embedding_forward.1} parent=1 // pred_fallthru
      _
    // Predicated region
    $region18: #{diffusion_embedding_forward.1} parent=1 // pred_check
      _
    $region19: #{diffusion_embedding_forward.1} parent=1 // pred_check_branch
      %43 = sbr.rel (0) target = $region21
    $region20: #{diffusion_embedding_forward.1} parent=1 // pred_region
      %s45 = ssub.s32 2048, 2048
      %46 = vsyncadd [#allocation6], %s45
      %s47 = sshll.u32 [#allocation7], 4
      %s48 = int_to_ptr.vmem [resolvable:$true] %s47
      %53 = dma.hbm_to_vmem [thread:$0]  %s4, 2048, %s48, [#allocation6], 128, 128, 8
    $region21: #{diffusion_embedding_forward.1} parent=1 // pred_fallthru
      _
    // Predicated region
    $region22: #{diffusion_embedding_forward.1} parent=1 // pred_check
      _
    $region23: #{diffusion_embedding_forward.1} parent=1 // pred_check_branch
      %55 = sbr.rel (0) target = $region25
    $region24: #{diffusion_embedding_forward.1} parent=1 // pred_region
      _
    $region25: #{diffusion_embedding_forward.1} parent=1 // pred_fallthru
      _
    // Predicated region
    $region26: #{diffusion_embedding_forward.1} parent=1 // pred_check
      _
    $region27: #{diffusion_embedding_forward.1} parent=1 // pred_check_branch
      %57 = sbr.rel (0) target = $region29
    $region28: #{diffusion_embedding_forward.1} parent=1 // pred_region
      %58 = dma.done [#allocation3], 1024
    $region29: #{diffusion_embedding_forward.1} parent=1 // pred_fallthru
      _
    // Predicated region
    $region30: #{diffusion_embedding_forward.1} parent=1 // pred_check
      _
    $region31: #{diffusion_embedding_forward.1} parent=1 // pred_check_branch
      %60 = sbr.rel (0) target = $region33
    $region32: #{diffusion_embedding_forward.1} parent=1 // pred_region
      %61 = dma.done [#allocation6], 2048
    $region33: #{diffusion_embedding_forward.1} parent=1 // pred_fallthru
      _
    // Predicated region
    $region34: #{diffusion_embedding_forward.1} parent=1 // pred_check
      _
    $region35: #{diffusion_embedding_forward.1} parent=1 // pred_check_branch
      %63 = sbr.rel (0) target = $region37
    $region36: #{diffusion_embedding_forward.1} parent=1 // pred_region
      %64 = dma.done [#allocation6], 2048
    $region37: #{diffusion_embedding_forward.1} parent=1 // pred_fallthru
      _
    %v65 = vld [vmem:[%s0] sm:$0xff]
    %v66 = vlaneseq
    %v67 = vand.u32 %v66, 127
    %68 = vset.pattern.permute.xlu0 0
    %69 = vperm.xlu0 %68, %v65
    %v70 = vpop.permute.xlu0 %69
    %vm71 = vcmp.eq.s32.totalorder %v67, %v70
    %v72 = vsel %vm71, 1, 0
    %v73 = vcvt.s32.f32 %v72
    %v74 = vld [vmem:[#allocation2] sm:$0xff]
    %v75 = vld [vmem:[#allocation2 + $0x8] sm:$0xff]
    %v76 = vld [vmem:[#allocation2 + $0x10] sm:$0xff]
    %v77 = vld [vmem:[#allocation2 + $0x18] sm:$0xff]
    %v78 = vld [vmem:[#allocation2 + $0x20] sm:$0xff]
    %v79 = vld [vmem:[#allocation2 + $0x28] sm:$0xff]
    %v80 = vld [vmem:[#allocation2 + $0x30] sm:$0xff]
    %v81 = vld [vmem:[#allocation2 + $0x38] sm:$0xff]
    %vm82 = vcmask 523264
    %v84 = vsel %vm82, %v73, 0
    %86 = vmatprep.subr.mxu0 0.0
    %87 = vmatpush1.msra.mxu0 0.0
    %88 = vmatprep.subr.mxu0 0.0
    %89 = vmatpush1.msra.mxu0 0.0
    %90 = vmatprep.subr.mxu0 0.0
    %91 = vmatpush1.msra.mxu0 0.0
    %92 = vmatprep.subr.mxu0 0.0
    %93 = vmatpush1.msra.mxu0 0.0
    %94 = vmatprep.subr.mxu0 0.0
    %95 = vmatpush1.msra.mxu0 0.0
    %96 = vmatprep.subr.mxu0 0.0
    %97 = vmatpush1.msra.mxu0 0.0
    %98 = vmatprep.subr.mxu0 0.0
    %99 = vmatpush1.msra.mxu0 0.0
    %100 = vmatprep.subr.mxu0 0.0
    %101 = vmatpush1.msra.mxu0 0.0
    %102 = vmatprep.subr.mxu0 0.0
    %103 = vmatpush1.msra.mxu0 %v81
    %104 = vmatprep.subr.mxu0 0.0
    %105 = vmatpush1.msra.mxu0 %v80
    %106 = vmatprep.subr.mxu0 0.0
    %107 = vmatpush1.msra.mxu0 %v79
    %108 = vmatprep.subr.mxu0 0.0
    %109 = vmatpush1.msra.mxu0 %v78
    %110 = vmatprep.subr.mxu0 0.0
    %111 = vmatpush1.msra.mxu0 %v77
    %112 = vmatprep.subr.mxu0 0.0
    %113 = vmatpush1.msra.mxu0 %v76
    %114 = vmatprep.subr.mxu0 0.0
    %115 = vmatpush1.msra.mxu0 %v75
    %116 = vmatprep.subr.mxu0 0.0
    %117 = vmatpush1.msra.mxu0 %v74
    %118 = vmatprep.subr.mxu0 0.0
    %119 = vmatpush2.msra.mxu0 0.0
    %120 = vmatprep.subr.mxu0 0.0
    %121 = vmatpush2.msra.mxu0 0.0
    %122 = vmatprep.subr.mxu0 0.0
    %123 = vmatpush2.msra.mxu0 0.0
    %124 = vmatprep.subr.mxu0 0.0
    %125 = vmatpush2.msra.mxu0 0.0
    %126 = vmatprep.subr.mxu0 0.0
    %127 = vmatpush2.msra.mxu0 0.0
    %128 = vmatprep.subr.mxu0 0.0
    %129 = vmatpush2.msra.mxu0 0.0
    %130 = vmatprep.subr.mxu0 0.0
    %131 = vmatpush2.msra.mxu0 0.0
    %132 = vmatprep.subr.mxu0 0.0
    %133 = vmatpush2.msra.mxu0 0.0
    %134 = vmatprep.subr.mxu0 0.0
    %135 = vmatpush2.msra.mxu0 0.0
    %136 = vmatprep.subr.mxu0 0.0
    %137 = vmatpush2.msra.mxu0 0.0
    %138 = vmatprep.subr.mxu0 0.0
    %139 = vmatpush2.msra.mxu0 0.0
    %140 = vmatprep.subr.mxu0 0.0
    %141 = vmatpush2.msra.mxu0 0.0
    %142 = vmatprep.subr.mxu0 0.0
    %143 = vmatpush2.msra.mxu0 0.0
    %144 = vmatprep.subr.mxu0 0.0
    %145 = vmatpush2.msra.mxu0 0.0
    %146 = vmatprep.subr.mxu0 0.0
    %147 = vmatpush2.msra.mxu0 0.0
    %148 = vmatprep.subr.mxu0 0.0
    %149 = vmatpush2.msra.mxu0 0.0
    %150 = vmatprep.mubr.f32.mxu0 0.0
    %151 = vmatmul.mubr.f32.gmra.mxu0 %v84
    %v152 = vpop.f32.mrf.mxu0
    %v153 = vadd.f32 0.0, %v152
    %v154 = vpop.f32.mrf.mxu0
    %155 = vdwg.mxu0
    %v156 = vld [vmem:[#allocation5] sm:$0xff]
    %v157 = vld [vmem:[#allocation5 + $0x8] sm:$0xff]
    %v158 = vld [vmem:[#allocation5 + $0x10] sm:$0xff]
    %v159 = vld [vmem:[#allocation5 + $0x18] sm:$0xff]
    %v160 = vld [vmem:[#allocation5 + $0x20] sm:$0xff]
    %v161 = vld [vmem:[#allocation5 + $0x28] sm:$0xff]
    %v162 = vld [vmem:[#allocation5 + $0x30] sm:$0xff]
    %v163 = vld [vmem:[#allocation5 + $0x38] sm:$0xff]
    %v164 = vld [vmem:[#allocation5 + $0x40] sm:$0xff]
    %v165 = vld [vmem:[#allocation5 + $0x48] sm:$0xff]
    %v166 = vld [vmem:[#allocation5 + $0x50] sm:$0xff]
    %v167 = vld [vmem:[#allocation5 + $0x58] sm:$0xff]
    %v168 = vld [vmem:[#allocation5 + $0x60] sm:$0xff]
    %v169 = vld [vmem:[#allocation5 + $0x68] sm:$0xff]
    %v170 = vld [vmem:[#allocation5 + $0x70] sm:$0xff]
    %v171 = vld [vmem:[#allocation5 + $0x78] sm:$0xff]
    %v172 = vld [vmem:[%s3] sm:$0x1]
    %v174 = vlaneseq
    %v175 = vshrl.u32 %v174, 7
    %v176 = vsub.s32 0, %v175
    %v177 = vrot.slane %v172, %v176
    %179 = vmatprep.subr.mxu0 0.0
    %180 = vmatpush1.msra.mxu0 %v171
    %181 = vmatprep.subr.mxu0 0.0
    %182 = vmatpush1.msra.mxu0 %v170
    %183 = vmatprep.subr.mxu0 0.0
    %184 = vmatpush1.msra.mxu0 %v169
    %185 = vmatprep.subr.mxu0 0.0
    %186 = vmatpush1.msra.mxu0 %v168
    %187 = vmatprep.subr.mxu0 0.0
    %188 = vmatpush1.msra.mxu0 %v167
    %189 = vmatprep.subr.mxu0 0.0
    %190 = vmatpush1.msra.mxu0 %v166
    %191 = vmatprep.subr.mxu0 0.0
    %192 = vmatpush1.msra.mxu0 %v165
    %193 = vmatprep.subr.mxu0 0.0
    %194 = vmatpush1.msra.mxu0 %v164
    %195 = vmatprep.subr.mxu0 0.0
    %196 = vmatpush1.msra.mxu0 %v163
    %197 = vmatprep.subr.mxu0 0.0
    %198 = vmatpush1.msra.mxu0 %v162
    %199 = vmatprep.subr.mxu0 0.0
    %200 = vmatpush1.msra.mxu0 %v161
    %201 = vmatprep.subr.mxu0 0.0
    %202 = vmatpush1.msra.mxu0 %v160
    %203 = vmatprep.subr.mxu0 0.0
    %204 = vmatpush1.msra.mxu0 %v159
    %205 = vmatprep.subr.mxu0 0.0
    %206 = vmatpush1.msra.mxu0 %v158
    %207 = vmatprep.subr.mxu0 0.0
    %208 = vmatpush1.msra.mxu0 %v157
    %209 = vmatprep.subr.mxu0 0.0
    %210 = vmatpush1.msra.mxu0 %v156
    %211 = vmatprep.subr.mxu0 0.0
    %212 = vmatpush2.msra.mxu0 0.0
    %213 = vmatprep.subr.mxu0 0.0
    %214 = vmatpush2.msra.mxu0 0.0
    %215 = vmatprep.subr.mxu0 0.0
    %216 = vmatpush2.msra.mxu0 0.0
    %217 = vmatprep.subr.mxu0 0.0
    %218 = vmatpush2.msra.mxu0 0.0
    %219 = vmatprep.subr.mxu0 0.0
    %220 = vmatpush2.msra.mxu0 0.0
    %221 = vmatprep.subr.mxu0 0.0
    %222 = vmatpush2.msra.mxu0 0.0
    %223 = vmatprep.subr.mxu0 0.0
    %224 = vmatpush2.msra.mxu0 0.0
    %225 = vmatprep.subr.mxu0 0.0
    %226 = vmatpush2.msra.mxu0 0.0
    %227 = vmatprep.subr.mxu0 0.0
    %228 = vmatpush2.msra.mxu0 0.0
    %229 = vmatprep.subr.mxu0 0.0
    %230 = vmatpush2.msra.mxu0 0.0
    %231 = vmatprep.subr.mxu0 0.0
    %232 = vmatpush2.msra.mxu0 0.0
    %233 = vmatprep.subr.mxu0 0.0
    %234 = vmatpush2.msra.mxu0 0.0
    %235 = vmatprep.subr.mxu0 0.0
    %236 = vmatpush2.msra.mxu0 0.0
    %237 = vmatprep.subr.mxu0 0.0
    %238 = vmatpush2.msra.mxu0 0.0
    %239 = vmatprep.subr.mxu0 0.0
    %240 = vmatpush2.msra.mxu0 0.0
    %241 = vmatprep.subr.mxu0 0.0
    %242 = vmatpush2.msra.mxu0 0.0
    %243 = vmatprep.mubr.f32.mxu0 0.0
    %244 = vmatmul.mubr.f32.gmra.mxu0 %v153
    %v245 = vpop.f32.mrf.mxu0
    %v246 = vadd.f32 %v177, %v245
    %v247 = vpop.f32.mrf.mxu0
    %248 = vdwg.mxu0
    %v249 = vmul.f32 %v246, 0.5
    %v250 = vtanh.pop %v249
    %v251 = vadd.f32 %v250, 1.0
    %v252 = vmul.f32 %v249, %v251
    %v253 = vld [vmem:[#allocation7] sm:$0xff]
    %v254 = vld [vmem:[#allocation7 + $0x8] sm:$0xff]
    %v255 = vld [vmem:[#allocation7 + $0x10] sm:$0xff]
    %v256 = vld [vmem:[#allocation7 + $0x18] sm:$0xff]
    %v257 = vld [vmem:[#allocation7 + $0x20] sm:$0xff]
    %v258 = vld [vmem:[#allocation7 + $0x28] sm:$0xff]
    %v259 = vld [vmem:[#allocation7 + $0x30] sm:$0xff]
    %v260 = vld [vmem:[#allocation7 + $0x38] sm:$0xff]
    %v261 = vld [vmem:[#allocation7 + $0x40] sm:$0xff]
    %v262 = vld [vmem:[#allocation7 + $0x48] sm:$0xff]
    %v263 = vld [vmem:[#allocation7 + $0x50] sm:$0xff]
    %v264 = vld [vmem:[#allocation7 + $0x58] sm:$0xff]
    %v265 = vld [vmem:[#allocation7 + $0x60] sm:$0xff]
    %v266 = vld [vmem:[#allocation7 + $0x68] sm:$0xff]
    %v267 = vld [vmem:[#allocation7 + $0x70] sm:$0xff]
    %v268 = vld [vmem:[#allocation7 + $0x78] sm:$0xff]
    %v269 = vld [vmem:[%s5] sm:$0x1]
    %v271 = vlaneseq
    %v272 = vshrl.u32 %v271, 7
    %v273 = vsub.s32 0, %v272
    %v274 = vrot.slane %v269, %v273
    %276 = vmatprep.subr.mxu0 0.0
    %277 = vmatpush1.msra.mxu0 %v268
    %278 = vmatprep.subr.mxu0 0.0
    %279 = vmatpush1.msra.mxu0 %v267
    %280 = vmatprep.subr.mxu0 0.0
    %281 = vmatpush1.msra.mxu0 %v266
    %282 = vmatprep.subr.mxu0 0.0
    %283 = vmatpush1.msra.mxu0 %v265
    %284 = vmatprep.subr.mxu0 0.0
    %285 = vmatpush1.msra.mxu0 %v264
    %286 = vmatprep.subr.mxu0 0.0
    %287 = vmatpush1.msra.mxu0 %v263
    %288 = vmatprep.subr.mxu0 0.0
    %289 = vmatpush1.msra.mxu0 %v262
    %290 = vmatprep.subr.mxu0 0.0
    %291 = vmatpush1.msra.mxu0 %v261
    %292 = vmatprep.subr.mxu0 0.0
    %293 = vmatpush1.msra.mxu0 %v260
    %294 = vmatprep.subr.mxu0 0.0
    %295 = vmatpush1.msra.mxu0 %v259
    %296 = vmatprep.subr.mxu0 0.0
    %297 = vmatpush1.msra.mxu0 %v258
    %298 = vmatprep.subr.mxu0 0.0
    %299 = vmatpush1.msra.mxu0 %v257
    %300 = vmatprep.subr.mxu0 0.0
    %301 = vmatpush1.msra.mxu0 %v256
    %302 = vmatprep.subr.mxu0 0.0
    %303 = vmatpush1.msra.mxu0 %v255
    %304 = vmatprep.subr.mxu0 0.0
    %305 = vmatpush1.msra.mxu0 %v254
    %306 = vmatprep.subr.mxu0 0.0
    %307 = vmatpush1.msra.mxu0 %v253
    %308 = vmatprep.subr.mxu0 0.0
    %309 = vmatpush2.msra.mxu0 0.0
    %310 = vmatprep.subr.mxu0 0.0
    %311 = vmatpush2.msra.mxu0 0.0
    %312 = vmatprep.subr.mxu0 0.0
    %313 = vmatpush2.msra.mxu0 0.0
    %314 = vmatprep.subr.mxu0 0.0
    %315 = vmatpush2.msra.mxu0 0.0
    %316 = vmatprep.subr.mxu0 0.0
    %317 = vmatpush2.msra.mxu0 0.0
    %318 = vmatprep.subr.mxu0 0.0
    %319 = vmatpush2.msra.mxu0 0.0
    %320 = vmatprep.subr.mxu0 0.0
    %321 = vmatpush2.msra.mxu0 0.0
    %322 = vmatprep.subr.mxu0 0.0
    %323 = vmatpush2.msra.mxu0 0.0
    %324 = vmatprep.subr.mxu0 0.0
    %325 = vmatpush2.msra.mxu0 0.0
    %326 = vmatprep.subr.mxu0 0.0
    %327 = vmatpush2.msra.mxu0 0.0
    %328 = vmatprep.subr.mxu0 0.0
    %329 = vmatpush2.msra.mxu0 0.0
    %330 = vmatprep.subr.mxu0 0.0
    %331 = vmatpush2.msra.mxu0 0.0
    %332 = vmatprep.subr.mxu0 0.0
    %333 = vmatpush2.msra.mxu0 0.0
    %334 = vmatprep.subr.mxu0 0.0
    %335 = vmatpush2.msra.mxu0 0.0
    %336 = vmatprep.subr.mxu0 0.0
    %337 = vmatpush2.msra.mxu0 0.0
    %338 = vmatprep.subr.mxu0 0.0
    %339 = vmatpush2.msra.mxu0 0.0
    %340 = vmatprep.mubr.f32.mxu0 0.0
    %341 = vmatmul.mubr.f32.gmra.mxu0 %v252
    %v342 = vpop.f32.mrf.mxu0
    %v343 = vadd.f32 %v274, %v342
    %v344 = vpop.f32.mrf.mxu0
    %345 = vdwg.mxu0
    %v346 = vmul.f32 %v343, 0.5
    %v347 = vtanh.pop %v346
    %v348 = vadd.f32 %v347, 1.0
    %v349 = vmul.f32 %v346, %v348
    %350 = vst [vmem:[#allocation8] sm:$0xff] %v349
    // Predicated region
    $region38: #{diffusion_embedding_forward.1} parent=1 // pred_check
      _
    $region39: #{diffusion_embedding_forward.1} parent=1 // pred_check_branch
      %352 = sbr.rel (0) target = $region41
    $region40: #{diffusion_embedding_forward.1} parent=1 // pred_region
      %s354 = ssub.s32 128, 128
      %355 = vsyncadd [#allocation4], %s354
      %s357 = sshll.u32 [#allocation8], 4
      %s358 = int_to_ptr.vmem [resolvable:$true] %s357
      %360 = dma.vmem_to_hbm [thread:$0]  %s358, 128, %s6, [#allocation4]
    $region41: #{diffusion_embedding_forward.1} parent=1 // pred_fallthru
      _
    // Predicated region
    $region42: #{diffusion_embedding_forward.1} parent=1 // pred_check
      _
    $region43: #{diffusion_embedding_forward.1} parent=1 // pred_check_branch
      %362 = sbr.rel (0) target = $region45
    $region44: #{diffusion_embedding_forward.1} parent=1 // pred_region
      %363 = dma.done [#allocation4], 128
    $region45: #{diffusion_embedding_forward.1} parent=1 // pred_fallthru
      _
    %364 = vsyncpa [#allocation3], 1
    %365 = vsyncpa [#allocation6], 1
    %366 = vsyncpa [#allocation4], 1

</llo_original>
